<compile_context>
chip_gen: v6e
topology: v6e:2x2x1
jax: 0.10.0
libtpu: 0.0.40
codegen_flags: <defaults>
</compile_context>

<pallas_src>
import functools
import math

import jax
import jax.numpy as jnp
from jax.experimental import pallas as pl
from jax.experimental.pallas import tpu as pltpu


# ---------------------------------------------------------------------------
# Kernel 1: fused packed-QKV projection writing attention-ready layouts.
#   Q -> (B, H, L, hd)   (head-major; 1/sqrt(hd) already folded into the weights)
#   K -> (B, G, hd, L)   (pre-transposed so flash scores are a plain matmul)
#   V -> (B, G, L, hd)
# Grid (B, L//tl, G): the kv-group axis is innermost so the x tile is fetched once
# per (batch, row-tile) and reused for every group / head.
# ---------------------------------------------------------------------------
def _qkv_proj_kernel(x_ref, wq_ref, wk_ref, wv_ref, bq_ref, bk_ref, bv_ref,
                     q_ref, k_ref, v_ref, *, ratio, mxu_dtype):
    x = x_ref[0].astype(mxu_dtype)                               # (tl, D)

    # Q: the `ratio` query heads of this kv group (scale pre-folded into wq/bq).
    for r in range(ratio):
        yq = jnp.dot(x, wq_ref[r], preferred_element_type=jnp.float32) + bq_ref[r]
        q_ref[0, r] = yq.astype(q_ref.dtype)

    # K, written transposed: (hd, tl) = wk (hd, D) contracted with x (tl, D) on D.
    kt = jax.lax.dot_general(wk_ref[0], x, (((1,), (1,)), ((), ())),
                             preferred_element_type=jnp.float32) + bk_ref[0]
    k_ref[0, 0] = kt.astype(k_ref.dtype)

    # V: (tl, hd)
    yv = jnp.dot(x, wv_ref[0], preferred_element_type=jnp.float32) + bv_ref[0]
    v_ref[0, 0] = yv.astype(v_ref.dtype)


# ---------------------------------------------------------------------------
# Kernel 2: flash attention (online softmax), GQA group per grid point.
# One K/V tile fetch serves all `ratio` query heads of the group; the static
# unrolled loop over heads does the same MXU / VALU / EUP work as a stacked
# big-M matmul while keeping every op 2-D (robust lowering).
# ---------------------------------------------------------------------------
def _flash_attn_kernel(q_ref, k_ref, v_ref, o_ref, m_sc, l_sc, acc_sc, *, ratio):
    ki = pl.program_id(3)

    @pl.when(ki == 0)
    def _():
        m_sc[...] = jnp.full(m_sc.shape, -jnp.inf, jnp.float32)
        l_sc[...] = jnp.zeros(l_sc.shape, jnp.float32)
        acc_sc[...] = jnp.zeros(acc_sc.shape, jnp.float32)

    kt = k_ref[0, 0]                  # (hd, tk) bf16, lane-dense, no per-step transpose
    v = v_ref[0, 0]                   # (tk, hd) bf16

    for r in range(ratio):
        q = q_ref[0, r]               # (tq, hd) bf16, already scaled, no cast needed
        s = jnp.dot(q, kt, preferred_element_type=jnp.float32)          # (tq, tk)
        m_prev = m_sc[r]
        m_new = jnp.maximum(m_prev, jnp.max(s, axis=-1, keepdims=True))
        alpha = jnp.exp(m_prev - m_new)
        p = jnp.exp(s - m_new)
        l_sc[r] = alpha * l_sc[r] + jnp.sum(p, axis=-1, keepdims=True)
        acc_sc[r] = alpha * acc_sc[r] + jnp.dot(p.astype(v.dtype), v,
                                                preferred_element_type=jnp.float32)
        m_sc[r] = m_new

    @pl.when(ki == pl.num_programs(3) - 1)
    def _():
        for r in range(ratio):
            inv_l = pl.reciprocal(l_sc[r], approx=True)   # EUP slot, not a VALU divide
            o_ref[0, r] = (acc_sc[r] * inv_l).astype(o_ref.dtype)


# ---------------------------------------------------------------------------
# Kernel 3: output projection consuming the head-major attention output directly
# (reduction over the head grid axis => no head-merge transpose pass).
# ---------------------------------------------------------------------------
def _out_proj_kernel(o_ref, w_ref, b_ref, y_ref, acc_ref):
    h = pl.program_id(3)

    @pl.when(h == 0)
    def _():
        acc_ref[...] = jnp.zeros_like(acc_ref)

    acc_ref[...] += jnp.dot(o_ref[0, 0], w_ref[0], preferred_element_type=jnp.float32)

    @pl.when(h == pl.num_programs(3) - 1)
    def _():
        y_ref[0] = (acc_ref[...] + b_ref[...]).astype(y_ref.dtype)


# ---------------------------------------------------------------------------
# One-time parameter preparation (cache the result across forward calls).
# ---------------------------------------------------------------------------
def prepare_params(w_in, b_in, w_out, b_out, *, num_heads, num_kv_heads,
                   mxu_dtype=jnp.bfloat16):
    """Split/transpose/reshape the packed QKV weight into attention-ready layouts,
    fold 1/sqrt(head_dim) into the Q projection, cast matmul operands to bf16.
    Biases stay f32 (added to f32 accumulators)."""
    d_total, D = w_in.shape
    H, G = num_heads, num_kv_heads
    hd = D // H
    kv = hd * G
    assert d_total == D + 2 * kv and w_out.shape == (D, D)
    scale = 1.0 / math.sqrt(hd)

    w_q, w_k, w_v = w_in[:D] * scale, w_in[D:D + kv], w_in[D + kv:]
    b_q, b_k, b_v = b_in[:D] * scale, b_in[D:D + kv], b_in[D + kv:]

    wq = jnp.transpose(w_q).reshape(D, H, hd).transpose(1, 0, 2).astype(mxu_dtype)  # (H, D, hd)
    wk = w_k.reshape(G, hd, D).astype(mxu_dtype)                                    # (G, hd, D)
    wv = jnp.transpose(w_v).reshape(D, G, hd).transpose(1, 0, 2).astype(mxu_dtype)  # (G, D, hd)
    wo = jnp.transpose(w_out).reshape(H, hd, D).astype(mxu_dtype)                   # (H, hd, D)

    bq = b_q.reshape(H, 1, hd).astype(jnp.float32)
    bk = b_k.reshape(G, hd, 1).astype(jnp.float32)
    bv = b_v.reshape(G, 1, hd).astype(jnp.float32)
    bo = b_out.reshape(1, D).astype(jnp.float32)
    return dict(wq=wq, wk=wk, wv=wv, wo=wo, bq=bq, bk=bk, bv=bv, bo=bo)


# ---------------------------------------------------------------------------
# Forward wrapper
# ---------------------------------------------------------------------------
def multi_head_attention(x, params, *, num_heads, num_kv_heads,
                         row_block=256, q_block=256, kv_block=512, out_col_block=512,
                         mxu_dtype=jnp.bfloat16, vmem_limit_bytes=None):
    """x: (B, L, D) self-attention input (q is k is v). `params` from prepare_params."""
    B, L, D = x.shape
    H, G = num_heads, num_kv_heads
    assert D % H == 0 and H % G == 0
    hd = D // H
    ratio = H // G

    tl = min(row_block, L)
    tq = min(q_block, L)
    tk = min(kv_block, L)
    tn = min(out_col_block, D)
    # TODO(synk): pad/mask ragged tiles; exact sequence/feature tiling required for now.
    assert L % tl == 0 and L % tq == 0 and L % tk == 0 and D % tn == 0

    extra = dict(vmem_limit_bytes=vmem_limit_bytes) if vmem_limit_bytes else {}

    # ---- 1) fused QKV projection, attention-ready bf16 layouts, one pass over x ----
    q, k, v = pl.pallas_call(
        functools.partial(_qkv_proj_kernel, ratio=ratio, mxu_dtype=mxu_dtype),
        out_shape=(jax.ShapeDtypeStruct((B, H, L, hd), mxu_dtype),
                   jax.ShapeDtypeStruct((B, G, hd, L), mxu_dtype),
                   jax.ShapeDtypeStruct((B, G, L, hd), mxu_dtype)),
        grid_spec=pltpu.PrefetchScalarGridSpec(
            num_scalar_prefetch=0,
            grid=(B, L // tl, G),
            in_specs=[
                pl.BlockSpec((1, tl, D), lambda b, i, g: (b, i, 0)),
                pl.BlockSpec((ratio, D, hd), lambda b, i, g: (g, 0, 0)),
                pl.BlockSpec((1, hd, D), lambda b, i, g: (g, 0, 0)),
                pl.BlockSpec((1, D, hd), lambda b, i, g: (g, 0, 0)),
                pl.BlockSpec((ratio, 1, hd), lambda b, i, g: (g, 0, 0)),
                pl.BlockSpec((1, hd, 1), lambda b, i, g: (g, 0, 0)),
                pl.BlockSpec((1, 1, hd), lambda b, i, g: (g, 0, 0)),
            ],
            out_specs=(
                pl.BlockSpec((1, ratio, tl, hd), lambda b, i, g: (b, g, i, 0)),
                pl.BlockSpec((1, 1, hd, tl), lambda b, i, g: (b, g, 0, i)),
                pl.BlockSpec((1, 1, tl, hd), lambda b, i, g: (b, g, i, 0)),
            ),
        ),
        compiler_params=pltpu.CompilerParams(
            dimension_semantics=("parallel", "parallel", "arbitrary"), **extra),
    )(x, params["wq"], params["wk"], params["wv"],
      params["bq"], params["bk"], params["bv"])

    # ---- 2) flash attention (online softmax); K/V tile shared by the whole group ----
    o = pl.pallas_call(
        functools.partial(_flash_attn_kernel, ratio=ratio),
        out_shape=jax.ShapeDtypeStruct((B, H, L, hd), mxu_dtype),
        grid_spec=pltpu.PrefetchScalarGridSpec(
            num_scalar_prefetch=0,
            grid=(B, G, L // tq, L // tk),
            in_specs=[
                pl.BlockSpec((1, ratio, tq, hd), lambda b, g, qi, ki: (b, g, qi, 0)),
                pl.BlockSpec((1, 1, hd, tk), lambda b, g, qi, ki: (b, g, 0, ki)),
                pl.BlockSpec((1, 1, tk, hd), lambda b, g, qi, ki: (b, g, ki, 0)),
            ],
            out_specs=pl.BlockSpec((1, ratio, tq, hd),
                                   lambda b, g, qi, ki: (b, g, qi, 0)),
            scratch_shapes=[
                pltpu.VMEM((ratio, tq, 1), jnp.float32),   # running max
                pltpu.VMEM((ratio, tq, 1), jnp.float32),   # running denom
                pltpu.VMEM((ratio, tq, hd), jnp.float32),  # output accumulator
            ],
        ),
        compiler_params=pltpu.CompilerParams(
            dimension_semantics=("parallel", "parallel", "parallel", "arbitrary"),
            **extra),
    )(q, k, v)

    # ---- 3) output projection: reduce over heads (no head-merge transpose pass) ----
    out = pl.pallas_call(
        _out_proj_kernel,
        out_shape=jax.ShapeDtypeStruct((B, L, D), x.dtype),
        grid_spec=pltpu.PrefetchScalarGridSpec(
            num_scalar_prefetch=0,
            grid=(B, L // tl, D // tn, H),
            in_specs=[
                pl.BlockSpec((1, 1, tl, hd), lambda b, i, j, h: (b, h, i, 0)),
                pl.BlockSpec((1, hd, tn), lambda b, i, j, h: (h, 0, j)),
                pl.BlockSpec((1, tn), lambda b, i, j, h: (0, j)),
            ],
            out_specs=pl.BlockSpec((1, tl, tn), lambda b, i, j, h: (b, i, j)),
            scratch_shapes=[pltpu.VMEM((tl, tn), jnp.float32)],
        ),
        compiler_params=pltpu.CompilerParams(
            dimension_semantics=("parallel", "parallel", "parallel", "arbitrary"),
            **extra),
    )(o, params["wo"], params["bo"])
    return out


# ---------------------------------------------------------------------------
# Pure-JAX reference (cast_dtype=float32 -> exact module semantics;
#                     cast_dtype=bfloat16 -> matches the kernels' bf16 storage/MXU).
# ---------------------------------------------------------------------------
def _reference(x, w_in, b_in, w_out, b_out, *, num_heads, num_kv_heads,
               cast_dtype=jnp.float32):
    B, L, D = x.shape
    hd = D // num_heads
    kv = hd * num_kv_heads
    ratio = num_heads // num_kv_heads

    def mm(a, b):
        return jnp.dot(a.astype(cast_dtype), b.astype(cast_dtype),
                       preferred_element_type=jnp.float32)

    proj = mm(x.reshape(B * L, D), w_in.T).reshape(B, L, -1) + b_in
    q = proj[..., :D].astype(cast_dtype)
    k = proj[..., D:D + kv].astype(cast_dtype)
    v = proj[..., D + kv:].astype(cast_dtype)
    q = q.reshape(B, L, num_heads, hd).transpose(0, 2, 1, 3)
    k = k.reshape(B, L, num_kv_heads, hd).transpose(0, 2, 1, 3)
    v = v.reshape(B, L, num_kv_heads, hd).transpose(0, 2, 1, 3)
    k = jnp.repeat(k, ratio, axis=1)
    v = jnp.repeat(v, ratio, axis=1)
    qs = (q.astype(jnp.float32) * (1.0 / math.sqrt(hd))).astype(cast_dtype)
    s = jnp.einsum("bhqd,bhkd->bhqk", qs, k, preferred_element_type=jnp.float32)
    p = jax.nn.softmax(s, axis=-1)
    o = jnp.einsum("bhqk,bhkd->bhqd", p.astype(cast_dtype), v,
                   preferred_element_type=jnp.float32).astype(cast_dtype)
    o = o.transpose(0, 2, 1, 3).reshape(B * L, D)
    return (mm(o, w_out.T) + b_out).reshape(B, L, D)


def _xavier_uniform(key, shape):
    fan_out, fan_in = shape
    limit = math.sqrt(6.0 / (fan_in + fan_out))
    return jax.random.uniform(key, shape, jnp.float32, -limit, limit)


if __name__ == "__main__":
    # Module config: embed_dim=32, num_heads=4, num_kv_heads=2 (GQA), bias=True.
    B, L, D = 2, 8, 32
    num_heads, num_kv_heads = 4, 2
    head_dim = D // num_heads
    kv_dim = head_dim * num_kv_heads
    d_total = D + 2 * kv_dim

    key = jax.random.PRNGKey(0)
    k_x, k_win, k_wout, k_bin, k_bout = jax.random.split(key, 5)

    x = jax.random.normal(k_x, (B, L, D), jnp.float32)
    # Weights as in reset_parameters (xavier_uniform); biases made nonzero here to
    # exercise the bias plumbing (reset_parameters would zero them).
    w_in = _xavier_uniform(k_win, (d_total, D))
    b_in = 0.1 * jax.random.normal(k_bin, (d_total,), jnp.float32)
    w_out = _xavier_uniform(k_wout, (D, D))
    b_out = 0.1 * jax.random.normal(k_bout, (D,), jnp.float32)

    params = prepare_params(w_in, b_in, w_out, b_out,
                            num_heads=num_heads, num_kv_heads=num_kv_heads)
    out = multi_head_attention(x, params, num_heads=num_heads,
                               num_kv_heads=num_kv_heads)
    out = jax.block_until_ready(out)
    assert out.shape == (B, L, D)

    # Tight check against a precision-matched (bf16-intermediates) reference,
    # loose check against the exact f32 module semantics (bf16 MXU noise only).
    ref_bf16 = _reference(x, w_in, b_in, w_out, b_out, num_heads=num_heads,
                          num_kv_heads=num_kv_heads, cast_dtype=jnp.bfloat16)
    ref_f32 = _reference(x, w_in, b_in, w_out, b_out, num_heads=num_heads,
                         num_kv_heads=num_kv_heads, cast_dtype=jnp.float32)
    assert jnp.allclose(out, ref_bf16, rtol=2e-2, atol=2e-2), \
        float(jnp.max(jnp.abs(out - ref_bf16)))
    assert jnp.allclose(out, ref_f32, rtol=5e-2, atol=1e-1), \
        float(jnp.max(jnp.abs(out - ref_f32)))

    # TODO(synk): dropout (training=True) and the optional pre-LayerNorm / qk-norm paths
    # are not implemented (module defaults disable them in inference).
    print("KERNEL_OK")
</pallas_src>

<mosaic_0001>
module attributes {stable_mosaic.version = 11 : i64} {
  func.func @_qkv_proj_kernel(%arg0: i32, %arg1: i32, %arg2: i32, %arg3: memref<1x8x32xf32, #tpu.memory_space<vmem>>, %arg4: memref<2x32x8xbf16, #tpu.memory_space<vmem>>, %arg5: memref<1x8x32xbf16, #tpu.memory_space<vmem>>, %arg6: memref<1x32x8xbf16, #tpu.memory_space<vmem>>, %arg7: memref<2x1x8xf32, #tpu.memory_space<vmem>>, %arg8: memref<1x8x1xf32, #tpu.memory_space<vmem>>, %arg9: memref<1x1x8xf32, #tpu.memory_space<vmem>>, %arg10: memref<1x2x8x8xbf16, #tpu.memory_space<vmem>>, %arg11: memref<1x1x8x8xbf16, #tpu.memory_space<vmem>>, %arg12: memref<1x1x8x8xbf16, #tpu.memory_space<vmem>>) attributes {dimension_semantics = [#tpu.dimension_semantics<parallel>, #tpu.dimension_semantics<parallel>, #tpu.dimension_semantics<arbitrary>], iteration_bounds = array<i64: 2, 1, 2>, scalar_prefetch = 0 : i64, scratch_operands = 0 : i64, tpu.core_type = #tpu.core_type<tc>, window_params = [{transform_indices = @transform_0, window_bounds = array<i64: 1, 8, 32>}, {transform_indices = @transform_1, window_bounds = array<i64: 2, 32, 8>}, {transform_indices = @transform_2, window_bounds = array<i64: 1, 8, 32>}, {transform_indices = @transform_3, window_bounds = array<i64: 1, 32, 8>}, {transform_indices = @transform_4, window_bounds = array<i64: 2, 1, 8>}, {transform_indices = @transform_5, window_bounds = array<i64: 1, 8, 1>}, {transform_indices = @transform_6, window_bounds = array<i64: 1, 1, 8>}, {transform_indices = @transform_7, window_bounds = array<i64: 1, 2, 8, 8>}, {transform_indices = @transform_8, window_bounds = array<i64: 1, 1, 8, 8>}, {transform_indices = @transform_9, window_bounds = array<i64: 1, 1, 8, 8>}]} {
    %c0 = arith.constant 0 : index
    %c0_0 = arith.constant 0 : index
    %c0_1 = arith.constant 0 : index
    %0 = vector.load %arg3[%c0, %c0_0, %c0_1] : memref<1x8x32xf32, #tpu.memory_space<vmem>>, vector<1x8x32xf32>
    %1 = vector.shape_cast %0 : vector<1x8x32xf32> to vector<8x32xf32>
    %2 = arith.truncf %1 : vector<8x32xf32> to vector<8x32xbf16>
    %c0_2 = arith.constant 0 : index
    %c0_3 = arith.constant 0 : index
    %c0_4 = arith.constant 0 : index
    %3 = vector.load %arg4[%c0_2, %c0_3, %c0_4] : memref<2x32x8xbf16, #tpu.memory_space<vmem>>, vector<1x32x8xbf16>
    %4 = vector.shape_cast %3 : vector<1x32x8xbf16> to vector<32x8xbf16>
    %cst = arith.constant dense<0.000000e+00> : vector<8x8xf32>
    %5 = tpu.matmul %2, %4, %cst {dimension_numbers = #tpu.dot_dimension_numbers<[1], [0], [0], [1], [0, 0, 1, 1], [], []>} : vector<8x32xbf16>, vector<32x8xbf16>, vector<8x8xf32> -> vector<8x8xf32>
    %c0_5 = arith.constant 0 : index
    %c0_6 = arith.constant 0 : index
    %c0_7 = arith.constant 0 : index
    %6 = vector.load %arg7[%c0_5, %c0_6, %c0_7] : memref<2x1x8xf32, #tpu.memory_space<vmem>>, vector<1x1x8xf32>
    %7 = vector.shape_cast %6 : vector<1x1x8xf32> to vector<1x8xf32>
    %8 = vector.broadcast %7 : vector<1x8xf32> to vector<8x8xf32>
    %9 = arith.addf %5, %8 : vector<8x8xf32>
    %10 = arith.truncf %9 : vector<8x8xf32> to vector<8x8xbf16>
    %c0_8 = arith.constant 0 : index
    %c0_9 = arith.constant 0 : index
    %c0_10 = arith.constant 0 : index
    %c0_11 = arith.constant 0 : index
    %11 = vector.load %arg10[%c0_8, %c0_9, %c0_10, %c0_11] : memref<1x2x8x8xbf16, #tpu.memory_space<vmem>>, vector<1x1x8x8xbf16>
    %12 = vector.shape_cast %11 : vector<1x1x8x8xbf16> to vector<8x8xbf16>
    %13 = vector.shape_cast %10 : vector<8x8xbf16> to vector<1x1x8x8xbf16>
    tpu.vector_store %arg10[%c0_8, %c0_9, %c0_10, %c0_11], %13 {strides = array<i32>} : memref<1x2x8x8xbf16, #tpu.memory_space<vmem>>, vector<1x1x8x8xbf16>,
    %c1 = arith.constant 1 : index
    %c0_12 = arith.constant 0 : index
    %c0_13 = arith.constant 0 : index
    %14 = vector.load %arg4[%c1, %c0_12, %c0_13] : memref<2x32x8xbf16, #tpu.memory_space<vmem>>, vector<1x32x8xbf16>
    %15 = vector.shape_cast %14 : vector<1x32x8xbf16> to vector<32x8xbf16>
    %cst_14 = arith.constant dense<0.000000e+00> : vector<8x8xf32>
    %16 = tpu.matmul %2, %15, %cst_14 {dimension_numbers = #tpu.dot_dimension_numbers<[1], [0], [0], [1], [0, 0, 1, 1], [], []>} : vector<8x32xbf16>, vector<32x8xbf16>, vector<8x8xf32> -> vector<8x8xf32>
    %c1_15 = arith.constant 1 : index
    %c0_16 = arith.constant 0 : index
    %c0_17 = arith.constant 0 : index
    %17 = vector.load %arg7[%c1_15, %c0_16, %c0_17] : memref<2x1x8xf32, #tpu.memory_space<vmem>>, vector<1x1x8xf32>
    %18 = vector.shape_cast %17 : vector<1x1x8xf32> to vector<1x8xf32>
    %19 = vector.broadcast %18 : vector<1x8xf32> to vector<8x8xf32>
    %20 = arith.addf %16, %19 : vector<8x8xf32>
    %21 = arith.truncf %20 : vector<8x8xf32> to vector<8x8xbf16>
    %c0_18 = arith.constant 0 : index
    %c1_19 = arith.constant 1 : index
    %c0_20 = arith.constant 0 : index
    %c0_21 = arith.constant 0 : index
    %22 = vector.load %arg10[%c0_18, %c1_19, %c0_20, %c0_21] : memref<1x2x8x8xbf16, #tpu.memory_space<vmem>>, vector<1x1x8x8xbf16>
    %23 = vector.shape_cast %22 : vector<1x1x8x8xbf16> to vector<8x8xbf16>
    %24 = vector.shape_cast %21 : vector<8x8xbf16> to vector<1x1x8x8xbf16>
    tpu.vector_store %arg10[%c0_18, %c1_19, %c0_20, %c0_21], %24 {strides = array<i32>} : memref<1x2x8x8xbf16, #tpu.memory_space<vmem>>, vector<1x1x8x8xbf16>,
    %c0_22 = arith.constant 0 : index
    %c0_23 = arith.constant 0 : index
    %c0_24 = arith.constant 0 : index
    %25 = vector.load %arg5[%c0_22, %c0_23, %c0_24] : memref<1x8x32xbf16, #tpu.memory_space<vmem>>, vector<1x8x32xbf16>
    %26 = vector.shape_cast %25 : vector<1x8x32xbf16> to vector<8x32xbf16>
    %cst_25 = arith.constant dense<0.000000e+00> : vector<8x8xf32>
    %27 = tpu.matmul %26, %2, %cst_25 {dimension_numbers = #tpu.dot_dimension_numbers<[1], [1], [0], [0], [0, 0, 1, 0], [], []>} : vector<8x32xbf16>, vector<8x32xbf16>, vector<8x8xf32> -> vector<8x8xf32>
    %c0_26 = arith.constant 0 : index
    %c0_27 = arith.constant 0 : index
    %c0_28 = arith.constant 0 : index
    %28 = vector.load %arg8[%c0_26, %c0_27, %c0_28] : memref<1x8x1xf32, #tpu.memory_space<vmem>>, vector<1x8x1xf32>
    %29 = vector.shape_cast %28 : vector<1x8x1xf32> to vector<8x1xf32>
    %30 = vector.broadcast %29 : vector<8x1xf32> to vector<8x8xf32>
    %31 = arith.addf %27, %30 : vector<8x8xf32>
    %32 = arith.truncf %31 : vector<8x8xf32> to vector<8x8xbf16>
    %c0_29 = arith.constant 0 : index
    %c0_30 = arith.constant 0 : index
    %c0_31 = arith.constant 0 : index
    %c0_32 = arith.constant 0 : index
    %33 = vector.load %arg11[%c0_29, %c0_30, %c0_31, %c0_32] : memref<1x1x8x8xbf16, #tpu.memory_space<vmem>>, vector<1x1x8x8xbf16>
    %34 = vector.shape_cast %33 : vector<1x1x8x8xbf16> to vector<8x8xbf16>
    %35 = vector.shape_cast %32 : vector<8x8xbf16> to vector<1x1x8x8xbf16>
    tpu.vector_store %arg11[%c0_29, %c0_30, %c0_31, %c0_32], %35 {strides = array<i32>} : memref<1x1x8x8xbf16, #tpu.memory_space<vmem>>, vector<1x1x8x8xbf16>,
    %c0_33 = arith.constant 0 : index
    %c0_34 = arith.constant 0 : index
    %c0_35 = arith.constant 0 : index
    %36 = vector.load %arg6[%c0_33, %c0_34, %c0_35] : memref<1x32x8xbf16, #tpu.memory_space<vmem>>, vector<1x32x8xbf16>
    %37 = vector.shape_cast %36 : vector<1x32x8xbf16> to vector<32x8xbf16>
    %cst_36 = arith.constant dense<0.000000e+00> : vector<8x8xf32>
    %38 = tpu.matmul %2, %37, %cst_36 {dimension_numbers = #tpu.dot_dimension_numbers<[1], [0], [0], [1], [0, 0, 1, 1], [], []>} : vector<8x32xbf16>, vector<32x8xbf16>, vector<8x8xf32> -> vector<8x8xf32>
    %c0_37 = arith.constant 0 : index
    %c0_38 = arith.constant 0 : index
    %c0_39 = arith.constant 0 : index
    %39 = vector.load %arg9[%c0_37, %c0_38, %c0_39] : memref<1x1x8xf32, #tpu.memory_space<vmem>>, vector<1x1x8xf32>
    %40 = vector.shape_cast %39 : vector<1x1x8xf32> to vector<1x8xf32>
    %41 = vector.broadcast %40 : vector<1x8xf32> to vector<8x8xf32>
    %42 = arith.addf %38, %41 : vector<8x8xf32>
    %43 = arith.truncf %42 : vector<8x8xf32> to vector<8x8xbf16>
    %c0_40 = arith.constant 0 : index
    %c0_41 = arith.constant 0 : index
    %c0_42 = arith.constant 0 : index
    %c0_43 = arith.constant 0 : index
    %44 = vector.load %arg12[%c0_40, %c0_41, %c0_42, %c0_43] : memref<1x1x8x8xbf16, #tpu.memory_space<vmem>>, vector<1x1x8x8xbf16>
    %45 = vector.shape_cast %44 : vector<1x1x8x8xbf16> to vector<8x8xbf16>
    %46 = vector.shape_cast %43 : vector<8x8xbf16> to vector<1x1x8x8xbf16>
    tpu.vector_store %arg12[%c0_40, %c0_41, %c0_42, %c0_43], %46 {strides = array<i32>} : memref<1x1x8x8xbf16, #tpu.memory_space<vmem>>, vector<1x1x8x8xbf16>,
    return
  }
  func.func @transform_0(%arg0: i32, %arg1: i32, %arg2: i32) -> (i32, i32, i32) {
    %c0_i32 = arith.constant 0 : i32
    %c0_i32_0 = arith.constant 0 : i32
    return %arg0, %arg1, %c0_i32 : i32, i32, i32
  }
  func.func @transform_1(%arg0: i32, %arg1: i32, %arg2: i32) -> (i32, i32, i32) {
    %c0_i32 = arith.constant 0 : i32
    %c0_i32_0 = arith.constant 0 : i32
    %c0_i32_1 = arith.constant 0 : i32
    return %arg2, %c0_i32, %c0_i32_0 : i32, i32, i32
  }
  func.func @transform_2(%arg0: i32, %arg1: i32, %arg2: i32) -> (i32, i32, i32) {
    %c0_i32 = arith.constant 0 : i32
    %c0_i32_0 = arith.constant 0 : i32
    %c0_i32_1 = arith.constant 0 : i32
    return %arg2, %c0_i32, %c0_i32_0 : i32, i32, i32
  }
  func.func @transform_3(%arg0: i32, %arg1: i32, %arg2: i32) -> (i32, i32, i32) {
    %c0_i32 = arith.constant 0 : i32
    %c0_i32_0 = arith.constant 0 : i32
    %c0_i32_1 = arith.constant 0 : i32
    return %arg2, %c0_i32, %c0_i32_0 : i32, i32, i32
  }
  func.func @transform_4(%arg0: i32, %arg1: i32, %arg2: i32) -> (i32, i32, i32) {
    %c0_i32 = arith.constant 0 : i32
    %c0_i32_0 = arith.constant 0 : i32
    %c0_i32_1 = arith.constant 0 : i32
    return %arg2, %c0_i32, %c0_i32_0 : i32, i32, i32
  }
  func.func @transform_5(%arg0: i32, %arg1: i32, %arg2: i32) -> (i32, i32, i32) {
    %c0_i32 = arith.constant 0 : i32
    %c0_i32_0 = arith.constant 0 : i32
    %c0_i32_1 = arith.constant 0 : i32
    return %arg2, %c0_i32, %c0_i32_0 : i32, i32, i32
  }
  func.func @transform_6(%arg0: i32, %arg1: i32, %arg2: i32) -> (i32, i32, i32) {
    %c0_i32 = arith.constant 0 : i32
    %c0_i32_0 = arith.constant 0 : i32
    %c0_i32_1 = arith.constant 0 : i32
    return %arg2, %c0_i32, %c0_i32_0 : i32, i32, i32
  }
  func.func @transform_7(%arg0: i32, %arg1: i32, %arg2: i32) -> (i32, i32, i32, i32) {
    %c0_i32 = arith.constant 0 : i32
    %c0_i32_0 = arith.constant 0 : i32
    return %arg0, %arg2, %arg1, %c0_i32 : i32, i32, i32, i32
  }
  func.func @transform_8(%arg0: i32, %arg1: i32, %arg2: i32) -> (i32, i32, i32, i32) {
    %c0_i32 = arith.constant 0 : i32
    %c0_i32_0 = arith.constant 0 : i32
    return %arg0, %arg2, %c0_i32, %arg1 : i32, i32, i32, i32
  }
  func.func @transform_9(%arg0: i32, %arg1: i32, %arg2: i32) -> (i32, i32, i32, i32) {
    %c0_i32 = arith.constant 0 : i32
    %c0_i32_0 = arith.constant 0 : i32
    return %arg0, %arg2, %arg1, %c0_i32 : i32, i32, i32, i32
  }
}

</mosaic_0001>

<llo_original>
// kernel: tpu_custom_call.1
$region0: #{tpu_custom_call.1}
  #allocation0 [shape = 'u32[]', space=smem, size = 0x4, offset = 0x4, fixed_abs, tag = 'smem constant byte address 0x4 - core index']
  #allocation1 [shape = 'u32[144,128]{1,0:T(1,128)}', space=vmem, size = 0x12000, scoped, tag = 'internal scratch']
  %s0 = inlined_call_operand.vmem [shape: f32[2,8,32], index: 0, kind: input, shape index: {}]
  %s1 = inlined_call_operand.vmem [shape: bf16[4,32,8], index: 1, kind: input, shape index: {}]
  %s2 = inlined_call_operand.vmem [shape: bf16[2,8,32], index: 2, kind: input, shape index: {}]
  %s3 = inlined_call_operand.vmem [shape: bf16[2,32,8], index: 3, kind: input, shape index: {}]
  %s4 = inlined_call_operand.vmem [shape: f32[4,1,8], index: 4, kind: input, shape index: {}]
  %s5 = inlined_call_operand.vmem [shape: f32[2,8,1], index: 5, kind: input, shape index: {}]
  %s6 = inlined_call_operand.vmem [shape: f32[2,1,8], index: 6, kind: input, shape index: {}]
  %s7 = inlined_call_operand.hbm [shape: bf16[2,4,8,8], index: 7, kind: output, shape index: {0}]
  %s8 = inlined_call_operand.hbm [shape: bf16[2,2,8,8], index: 8, kind: output, shape index: {1}]
  %s9 = inlined_call_operand.hbm [shape: bf16[2,2,8,8], index: 9, kind: output, shape index: {2}]
  %10 = xla_tuple %s7, %s8, %s9
  %s11 = sld [smem:[#allocation0]]
  $region77: #{tpu_custom_call.1} parent=0
    _
  %s13 = ssub.s32 1, %s11
  %s14 = scalar_select 0, %s13, %s11
  $region1: #{tpu_custom_call.1} parent=0
    #allocation2 [shape = 'u8[8192]{0}', space=vmem, size = 0x2000, scoped, tag = 'output window, operand 0']
    #allocation3 [shape = 's32[2]{0}', space=sflag, size = 0x8, scoped, tag = 'scoped memory for tpu_custom_call.1']
    #allocation4 [shape = 'u8[4096]{0}', space=vmem, size = 0x1000, scoped, tag = 'output window, operand 1']
    #allocation5 [shape = 's32[2]{0}', space=sflag, size = 0x8, scoped, tag = 'scoped memory for tpu_custom_call.1']
    #allocation6 [shape = 'u8[4096]{0}', space=vmem, size = 0x1000, scoped, tag = 'output window, operand 2']
    %15 = vsyncpa [#allocation3], 0
    %s16 = scalar_lea.sflag [#allocation3], 1
    %17 = vsyncpa %s16, 0
    %18 = vsyncpa [#allocation5], 0
    %s19 = scalar_lea.sflag [#allocation5], 1
    %20 = vsyncpa %s19, 0
    loop: start=0, step=1, limit=6
    $region2: #{tpu_custom_call.1} parent=1 // loop_pre_header
      _
    $region3: #{tpu_custom_call.1} parent=1 // loop_header
      %s22 = sphi 0, %s26
      %p23 = scmp.ge.s32.totalorder %s22, 6
      %s29 = sphi 0, %s48
      %s30 = sphi 0, %s44
      %s31 = sphi 0, %s40
      %s32 = sphi 0, %s29
      %s33 = sphi 0, %s30
      %s34 = sphi 0, %s31
      %s35 = sphi 0, %s32
      %s36 = sphi 0, %s33
      %s37 = sphi 0, %s34
      %s53 = sphi 0, %s55
      %s56 = sphi 0, %s53
      %s57 = sphi 0, %s56
      %s73 = sphi 0, %s57
      %s79 = sphi 0, %s81
      %s82 = sphi 0, %s79
      %s83 = sphi 0, %s82
      %s99 = sphi 0, %s83
      %s105 = sphi 0, %s107
      %s108 = sphi 0, %s105
      %s109 = sphi 0, %s108
      %s125 = sphi 0, %s109
      %s131 = sphi 0, %s133
      %s134 = sphi 0, %s131
      %s135 = sphi 0, %s134
      %s151 = sphi 0, %s135
      %s157 = sphi 0, %s159
      %s160 = sphi 0, %s157
      %s161 = sphi 0, %s160
      %s177 = sphi 0, %s161
      %s183 = sphi 0, %s185
      %s186 = sphi 0, %s183
      %s187 = sphi 0, %s186
      %s203 = sphi 0, %s187
      %s209 = sphi 0, %s211
      %s212 = sphi 0, %s209
      %s213 = sphi 0, %s212
      %s229 = sphi 0, %s213
      %s239 = sphi 0, %s241
      %s242 = sphi 0, %s239
      %s243 = sphi 0, %s242
      %s259 = sphi 0, %s243
      %s269 = sphi 0, %s271
      %s272 = sphi 0, %s269
      %s273 = sphi 0, %s272
      %s289 = sphi 0, %s273
      %s299 = sphi 0, %s301
      %s302 = sphi 0, %s299
      %s303 = sphi 0, %s302
      %s319 = sphi 0, %s303
    $region4: #{tpu_custom_call.1} parent=1 // loop_header_branch
      %25 = sbr.rel (%p23) target = $region8
    $region5: #{tpu_custom_call.1} parent=1 // loop_body
      %s27 = ssub.s32 %s22, 1
      %s28 = ssub.s32 %s22, 2
      %s38 = sadd.s32 1, %s31
      %p39 = scmp.ge.s32.totalorder %s38, 2
      %s40 = scalar_select %p39, 0, %s38
      %s41 = sadd.s32 1, %s30
      %s42 = scalar_select %p39, %s41, %s30
      %p43 = scmp.ge.s32.totalorder %s42, 1
      %s44 = scalar_select %p43, 0, %s42
      %s45 = sadd.s32 1, %s29
      %s46 = scalar_select %p43, %s45, %s29
      %p47 = scmp.ge.s32.totalorder %s46, 2
      %s48 = scalar_select %p47, 0, %s46
      %s49 = ssub.s32 %s29, %s48
      %s50 = ssub.s32 %s30, %s44
      %s51 = sor.u32 %s49, %s50
      %p52 = scmp.eq.s32.totalorder %s51, 0
      %s54 = sadd.s32 %s53, 1
      %s55 = scalar_select %p52, %s53, %s54
      %p58 = pneg %p52
      %p59 = scmp.eq.s32.totalorder %s22, 3
      %p60 = por %p58, %p59
      %p61 = scmp.ne.s32.totalorder %s53, %s56
      %p62 = scmp.eq.s32.totalorder %s22, 0
      %p63 = por %p61, %p62
      %p64 = scmp.ne.s32.totalorder %s53, %s56
      %p65 = scmp.eq.s32.totalorder %s27, 3
      %p66 = por %p64, %p65
      %p67 = scmp.ne.s32.totalorder %s56, %s57
      %p68 = scmp.eq.s32.totalorder %s27, 0
      %p69 = por %p67, %p68
      %p70 = scmp.ne.s32.totalorder %s56, %s57
      %p71 = scmp.eq.s32.totalorder %s28, 3
      %p72 = por %p70, %p71
      %p74 = scmp.ne.s32.totalorder %s57, %s73
      %p75 = scmp.eq.s32.totalorder %s28, 0
      %p76 = por %p74, %p75
      %s77 = ssub.s32 %s31, %s40
      %p78 = scmp.eq.s32.totalorder %s77, 0
      %s80 = sadd.s32 %s79, 1
      %s81 = scalar_select %p78, %s79, %s80
      %p84 = pneg %p78
      %p85 = scmp.eq.s32.totalorder %s22, 3
      %p86 = por %p84, %p85
      %p87 = scmp.ne.s32.totalorder %s79, %s82
      %p88 = scmp.eq.s32.totalorder %s22, 0
      %p89 = por %p87, %p88
      %p90 = scmp.ne.s32.totalorder %s79, %s82
      %p91 = scmp.eq.s32.totalorder %s27, 3
      %p92 = por %p90, %p91
      %p93 = scmp.ne.s32.totalorder %s82, %s83
      %p94 = scmp.eq.s32.totalorder %s27, 0
      %p95 = por %p93, %p94
      %p96 = scmp.ne.s32.totalorder %s82, %s83
      %p97 = scmp.eq.s32.totalorder %s28, 3
      %p98 = por %p96, %p97
      %p100 = scmp.ne.s32.totalorder %s83, %s99
      %p101 = scmp.eq.s32.totalorder %s28, 0
      %p102 = por %p100, %p101
      %s103 = ssub.s32 %s31, %s40
      %p104 = scmp.eq.s32.totalorder %s103, 0
      %s106 = sadd.s32 %s105, 1
      %s107 = scalar_select %p104, %s105, %s106
      %p110 = pneg %p104
      %p111 = scmp.eq.s32.totalorder %s22, 3
      %p112 = por %p110, %p111
      %p113 = scmp.ne.s32.totalorder %s105, %s108
      %p114 = scmp.eq.s32.totalorder %s22, 0
      %p115 = por %p113, %p114
      %p116 = scmp.ne.s32.totalorder %s105, %s108
      %p117 = scmp.eq.s32.totalorder %s27, 3
      %p118 = por %p116, %p117
      %p119 = scmp.ne.s32.totalorder %s108, %s109
      %p120 = scmp.eq.s32.totalorder %s27, 0
      %p121 = por %p119, %p120
      %p122 = scmp.ne.s32.totalorder %s108, %s109
      %p123 = scmp.eq.s32.totalorder %s28, 3
      %p124 = por %p122, %p123
      %p126 = scmp.ne.s32.totalorder %s109, %s125
      %p127 = scmp.eq.s32.totalorder %s28, 0
      %p128 = por %p126, %p127
      %s129 = ssub.s32 %s31, %s40
      %p130 = scmp.eq.s32.totalorder %s129, 0
      %s132 = sadd.s32 %s131, 1
      %s133 = scalar_select %p130, %s131, %s132
      %p136 = pneg %p130
      %p137 = scmp.eq.s32.totalorder %s22, 3
      %p138 = por %p136, %p137
      %p139 = scmp.ne.s32.totalorder %s131, %s134
      %p140 = scmp.eq.s32.totalorder %s22, 0
      %p141 = por %p139, %p140
      %p142 = scmp.ne.s32.totalorder %s131, %s134
      %p143 = scmp.eq.s32.totalorder %s27, 3
      %p144 = por %p142, %p143
      %p145 = scmp.ne.s32.totalorder %s134, %s135
      %p146 = scmp.eq.s32.totalorder %s27, 0
      %p147 = por %p145, %p146
      %p148 = scmp.ne.s32.totalorder %s134, %s135
      %p149 = scmp.eq.s32.totalorder %s28, 3
      %p150 = por %p148, %p149
      %p152 = scmp.ne.s32.totalorder %s135, %s151
      %p153 = scmp.eq.s32.totalorder %s28, 0
      %p154 = por %p152, %p153
      %s155 = ssub.s32 %s31, %s40
      %p156 = scmp.eq.s32.totalorder %s155, 0
      %s158 = sadd.s32 %s157, 1
      %s159 = scalar_select %p156, %s157, %s158
      %p162 = pneg %p156
      %p163 = scmp.eq.s32.totalorder %s22, 3
      %p164 = por %p162, %p163
      %p165 = scmp.ne.s32.totalorder %s157, %s160
      %p166 = scmp.eq.s32.totalorder %s22, 0
      %p167 = por %p165, %p166
      %p168 = scmp.ne.s32.totalorder %s157, %s160
      %p169 = scmp.eq.s32.totalorder %s27, 3
      %p170 = por %p168, %p169
      %p171 = scmp.ne.s32.totalorder %s160, %s161
      %p172 = scmp.eq.s32.totalorder %s27, 0
      %p173 = por %p171, %p172
      %p174 = scmp.ne.s32.totalorder %s160, %s161
      %p175 = scmp.eq.s32.totalorder %s28, 3
      %p176 = por %p174, %p175
      %p178 = scmp.ne.s32.totalorder %s161, %s177
      %p179 = scmp.eq.s32.totalorder %s28, 0
      %p180 = por %p178, %p179
      %s181 = ssub.s32 %s31, %s40
      %p182 = scmp.eq.s32.totalorder %s181, 0
      %s184 = sadd.s32 %s183, 1
      %s185 = scalar_select %p182, %s183, %s184
      %p188 = pneg %p182
      %p189 = scmp.eq.s32.totalorder %s22, 3
      %p190 = por %p188, %p189
      %p191 = scmp.ne.s32.totalorder %s183, %s186
      %p192 = scmp.eq.s32.totalorder %s22, 0
      %p193 = por %p191, %p192
      %p194 = scmp.ne.s32.totalorder %s183, %s186
      %p195 = scmp.eq.s32.totalorder %s27, 3
      %p196 = por %p194, %p195
      %p197 = scmp.ne.s32.totalorder %s186, %s187
      %p198 = scmp.eq.s32.totalorder %s27, 0
      %p199 = por %p197, %p198
      %p200 = scmp.ne.s32.totalorder %s186, %s187
      %p201 = scmp.eq.s32.totalorder %s28, 3
      %p202 = por %p200, %p201
      %p204 = scmp.ne.s32.totalorder %s187, %s203
      %p205 = scmp.eq.s32.totalorder %s28, 0
      %p206 = por %p204, %p205
      %s207 = ssub.s32 %s31, %s40
      %p208 = scmp.eq.s32.totalorder %s207, 0
      %s210 = sadd.s32 %s209, 1
      %s211 = scalar_select %p208, %s209, %s210
      %p214 = pneg %p208
      %p215 = scmp.eq.s32.totalorder %s22, 3
      %p216 = por %p214, %p215
      %p217 = scmp.ne.s32.totalorder %s209, %s212
      %p218 = scmp.eq.s32.totalorder %s22, 0
      %p219 = por %p217, %p218
      %p220 = scmp.ne.s32.totalorder %s209, %s212
      %p221 = scmp.eq.s32.totalorder %s27, 3
      %p222 = por %p220, %p221
      %p223 = scmp.ne.s32.totalorder %s212, %s213
      %p224 = scmp.eq.s32.totalorder %s27, 0
      %p225 = por %p223, %p224
      %p226 = scmp.ne.s32.totalorder %s212, %s213
      %p227 = scmp.eq.s32.totalorder %s28, 3
      %p228 = por %p226, %p227
      %p230 = scmp.ne.s32.totalorder %s213, %s229
      %p231 = scmp.eq.s32.totalorder %s28, 0
      %p232 = por %p230, %p231
      %s233 = ssub.s32 %s29, %s48
      %s234 = ssub.s32 %s31, %s40
      %s235 = sor.u32 %s233, %s234
      %s236 = ssub.s32 %s30, %s44
      %s237 = sor.u32 %s235, %s236
      %p238 = scmp.eq.s32.totalorder %s237, 0
      %s240 = sadd.s32 %s239, 1
      %s241 = scalar_select %p238, %s239, %s240
      %p244 = pneg %p238
      %p245 = scmp.eq.s32.totalorder %s22, 3
      %p246 = por %p244, %p245
      %p247 = scmp.ne.s32.totalorder %s239, %s242
      %p248 = scmp.eq.s32.totalorder %s22, 0
      %p249 = por %p247, %p248
      %p250 = scmp.ne.s32.totalorder %s239, %s242
      %p251 = scmp.eq.s32.totalorder %s27, 3
      %p252 = por %p250, %p251
      %p253 = scmp.ne.s32.totalorder %s242, %s243
      %p254 = scmp.eq.s32.totalorder %s27, 0
      %p255 = por %p253, %p254
      %p256 = scmp.ne.s32.totalorder %s242, %s243
      %p257 = scmp.eq.s32.totalorder %s28, 3
      %p258 = por %p256, %p257
      %p260 = scmp.ne.s32.totalorder %s243, %s259
      %p261 = scmp.eq.s32.totalorder %s28, 0
      %p262 = por %p260, %p261
      %s263 = ssub.s32 %s29, %s48
      %s264 = ssub.s32 %s31, %s40
      %s265 = sor.u32 %s263, %s264
      %s266 = ssub.s32 %s30, %s44
      %s267 = sor.u32 %s265, %s266
      %p268 = scmp.eq.s32.totalorder %s267, 0
      %s270 = sadd.s32 %s269, 1
      %s271 = scalar_select %p268, %s269, %s270
      %p274 = pneg %p268
      %p275 = scmp.eq.s32.totalorder %s22, 3
      %p276 = por %p274, %p275
      %p277 = scmp.ne.s32.totalorder %s269, %s272
      %p278 = scmp.eq.s32.totalorder %s22, 0
      %p279 = por %p277, %p278
      %p280 = scmp.ne.s32.totalorder %s269, %s272
      %p281 = scmp.eq.s32.totalorder %s27, 3
      %p282 = por %p280, %p281
      %p283 = scmp.ne.s32.totalorder %s272, %s273
      %p284 = scmp.eq.s32.totalorder %s27, 0
      %p285 = por %p283, %p284
      %p286 = scmp.ne.s32.totalorder %s272, %s273
      %p287 = scmp.eq.s32.totalorder %s28, 3
      %p288 = por %p286, %p287
      %p290 = scmp.ne.s32.totalorder %s273, %s289
      %p291 = scmp.eq.s32.totalorder %s28, 0
      %p292 = por %p290, %p291
      %s293 = ssub.s32 %s29, %s48
      %s294 = ssub.s32 %s31, %s40
      %s295 = sor.u32 %s293, %s294
      %s296 = ssub.s32 %s30, %s44
      %s297 = sor.u32 %s295, %s296
      %p298 = scmp.eq.s32.totalorder %s297, 0
      %s300 = sadd.s32 %s299, 1
      %s301 = scalar_select %p298, %s299, %s300
      %p304 = pneg %p298
      %p305 = scmp.eq.s32.totalorder %s22, 3
      %p306 = por %p304, %p305
      %p307 = scmp.ne.s32.totalorder %s299, %s302
      %p308 = scmp.eq.s32.totalorder %s22, 0
      %p309 = por %p307, %p308
      %p310 = scmp.ne.s32.totalorder %s299, %s302
      %p311 = scmp.eq.s32.totalorder %s27, 3
      %p312 = por %p310, %p311
      %p313 = scmp.ne.s32.totalorder %s302, %s303
      %p314 = scmp.eq.s32.totalorder %s27, 0
      %p315 = por %p313, %p314
      %p316 = scmp.ne.s32.totalorder %s302, %s303
      %p317 = scmp.eq.s32.totalorder %s28, 3
      %p318 = por %p316, %p317
      %p320 = scmp.ne.s32.totalorder %s303, %s319
      %p321 = scmp.eq.s32.totalorder %s28, 0
      %p322 = por %p320, %p321
      %p323 = scmp.le.s32.totalorder 1, %s22
      %p324 = scmp.lt.s32.totalorder %s22, 5
      %p325 = pnand %p323, %p324
      %p326 = pneg %p325
      // Predicated region
      $region9: #{tpu_custom_call.1} parent=5 // pred_check
        _
      $region10: #{tpu_custom_call.1} parent=5 // pred_check_branch
        %328 = sbr.rel (%p325) target = $region12
      $region11: #{tpu_custom_call.1} parent=5 // pred_region
        %s329 = ssub.s32 %s22, 1
      $region12: #{tpu_custom_call.1} parent=5 // pred_fallthru
        _
      %p330 = scmp.lt.s32.totalorder %s22, 4
      // Predicated region
      $region13: #{tpu_custom_call.1} parent=5 // pred_check
        %p331 = pneg %p330
      $region14: #{tpu_custom_call.1} parent=5 // pred_check_branch
        %333 = sbr.rel (%p331) target = $region16
      $region15: #{tpu_custom_call.1} parent=5 // pred_region
        // Predicated region
        $region17: #{tpu_custom_call.1} parent=15 // pred_check
          %p334 = pneg %p63
        $region18: #{tpu_custom_call.1} parent=15 // pred_check_branch
          %336 = sbr.rel (%p334) target = $region20
        $region19: #{tpu_custom_call.1} parent=15 // pred_region
          %p337 = scmp.lt.s32.totalorder %s29, 1
          %s338 = scalar_select %p337, %s29, 1
          %p339 = scmp.lt.s32.totalorder %s30, 0
          %s340 = scalar_select %p339, %s30, 0
          %s341 = sadd.s32 %s340, %s338
          %s342 = smul.addr %s341, 8
          %s343 = scalar_lea.vmem %s0, %s342
        $region20: #{tpu_custom_call.1} parent=15 // pred_fallthru
          _
        // Predicated region
        $region21: #{tpu_custom_call.1} parent=15 // pred_check
          %p344 = pneg %p89
        $region22: #{tpu_custom_call.1} parent=15 // pred_check_branch
          %346 = sbr.rel (%p344) target = $region24
        $region23: #{tpu_custom_call.1} parent=15 // pred_region
          %s347 = smul.u32 2, %s31
          %p348 = scmp.lt.s32.totalorder %s347, 3
          %s349 = scalar_select %p348, %s347, 3
          %s350 = smul.addr %s349, 4
          %s351 = smul.addr %s350, 4
          %s352 = scalar_lea.vmem %s1, %s351
          %s353 = smul.u32 2, %s31
        $region24: #{tpu_custom_call.1} parent=15 // pred_fallthru
          _
        // Predicated region
        $region25: #{tpu_custom_call.1} parent=15 // pred_check
          %p354 = pneg %p115
        $region26: #{tpu_custom_call.1} parent=15 // pred_check_branch
          %356 = sbr.rel (%p354) target = $region28
        $region27: #{tpu_custom_call.1} parent=15 // pred_region
          %p357 = scmp.lt.s32.totalorder %s31, 1
          %s358 = scalar_select %p357, %s31, 1
          %s359 = smul.addr %s358, 4
          %s360 = scalar_lea.vmem %s2, %s359
        $region28: #{tpu_custom_call.1} parent=15 // pred_fallthru
          _
        // Predicated region
        $region29: #{tpu_custom_call.1} parent=15 // pred_check
          %p361 = pneg %p141
        $region30: #{tpu_custom_call.1} parent=15 // pred_check_branch
          %363 = sbr.rel (%p361) target = $region32
        $region31: #{tpu_custom_call.1} parent=15 // pred_region
          %p364 = scmp.lt.s32.totalorder %s31, 1
          %s365 = scalar_select %p364, %s31, 1
          %s366 = smul.addr %s365, 4
          %s367 = smul.addr %s366, 4
          %s368 = scalar_lea.vmem %s3, %s367
        $region32: #{tpu_custom_call.1} parent=15 // pred_fallthru
          _
        // Predicated region
        $region33: #{tpu_custom_call.1} parent=15 // pred_check
          %p369 = pneg %p167
        $region34: #{tpu_custom_call.1} parent=15 // pred_check_branch
          %371 = sbr.rel (%p369) target = $region36
        $region35: #{tpu_custom_call.1} parent=15 // pred_region
          %s372 = smul.u32 2, %s31
          %p373 = scmp.lt.s32.totalorder %s372, 3
          %s374 = scalar_select %p373, %s372, 3
          %s375 = scalar_lea.vmem %s4, %s374
          %s376 = smul.u32 2, %s31
        $region36: #{tpu_custom_call.1} parent=15 // pred_fallthru
          _
        // Predicated region
        $region37: #{tpu_custom_call.1} parent=15 // pred_check
          %p377 = pneg %p193
        $region38: #{tpu_custom_call.1} parent=15 // pred_check_branch
          %379 = sbr.rel (%p377) target = $region40
        $region39: #{tpu_custom_call.1} parent=15 // pred_region
          %p380 = scmp.lt.s32.totalorder %s31, 1
          %s381 = scalar_select %p380, %s31, 1
          %s382 = smul.addr %s381, 8
          %s383 = scalar_lea.vmem %s5, %s382
        $region40: #{tpu_custom_call.1} parent=15 // pred_fallthru
          _
        // Predicated region
        $region41: #{tpu_custom_call.1} parent=15 // pred_check
          %p384 = pneg %p219
        $region42: #{tpu_custom_call.1} parent=15 // pred_check_branch
          %386 = sbr.rel (%p384) target = $region44
        $region43: #{tpu_custom_call.1} parent=15 // pred_region
          %p387 = scmp.lt.s32.totalorder %s31, 1
          %s388 = scalar_select %p387, %s31, 1
          %s389 = scalar_lea.vmem %s6, %s388
        $region44: #{tpu_custom_call.1} parent=15 // pred_fallthru
          _
      $region16: #{tpu_custom_call.1} parent=5 // pred_fallthru
        _
      %p390 = scmp.le.s32.totalorder 1, %s22
      %p391 = scmp.lt.s32.totalorder %s22, 5
      %p392 = pnand %p390, %p391
      %p393 = pneg %p392
      // Predicated region
      $region45: #{tpu_custom_call.1} parent=5 // pred_check
        _
      $region46: #{tpu_custom_call.1} parent=5 // pred_check_branch
        %395 = sbr.rel (%p392) target = $region48
      $region47: #{tpu_custom_call.1} parent=5 // pred_region
        %s396 = ssub.s32 %s22, 1
        %p397 = scmp.lt.s32.totalorder %s32, 1
        %s398 = scalar_select %p397, %s32, 1
        %p399 = scmp.lt.s32.totalorder %s33, 0
        %s400 = scalar_select %p399, %s33, 0
        %s401 = sadd.s32 %s400, %s398
        %s402 = smul.addr %s401, 8
        %s403 = scalar_lea.vmem %s0, %s402
        %p404 = pneg %p69
        %p405 = pneg %p66
        %s406 = smul.u32 2, %s34
        %p407 = scmp.lt.s32.totalorder %s406, 3
        %s408 = scalar_select %p407, %s406, 3
        %s409 = smul.addr %s408, 4
        %s410 = smul.addr %s409, 4
        %s411 = scalar_lea.vmem %s1, %s410
        %p412 = pneg %p95
        %p413 = pneg %p92
        %p414 = scmp.lt.s32.totalorder %s34, 1
        %s415 = scalar_select %p414, %s34, 1
        %s416 = smul.addr %s415, 4
        %s417 = scalar_lea.vmem %s2, %s416
        %p418 = pneg %p121
        %p419 = pneg %p118
        %p420 = scmp.lt.s32.totalorder %s34, 1
        %s421 = scalar_select %p420, %s34, 1
        %s422 = smul.addr %s421, 4
        %s423 = smul.addr %s422, 4
        %s424 = scalar_lea.vmem %s3, %s423
        %p425 = pneg %p147
        %p426 = pneg %p144
        %s427 = smul.u32 2, %s34
        %p428 = scmp.lt.s32.totalorder %s427, 3
        %s429 = scalar_select %p428, %s427, 3
        %s430 = scalar_lea.vmem %s4, %s429
        %p431 = pneg %p173
        %p432 = pneg %p170
        %p433 = scmp.lt.s32.totalorder %s34, 1
        %s434 = scalar_select %p433, %s34, 1
        %s435 = smul.addr %s434, 8
        %s436 = scalar_lea.vmem %s5, %s435
        %p437 = pneg %p199
        %p438 = pneg %p196
        %p439 = scmp.lt.s32.totalorder %s34, 1
        %s440 = scalar_select %p439, %s34, 1
        %s441 = scalar_lea.vmem %s6, %s440
        %p442 = pneg %p225
        %p443 = pneg %p222
        %p444 = pneg %p255
        %p445 = pneg %p252
        %s446 = sand.u32 %s242, 1
        %s447 = scalar_lea.sflag [#allocation3], %s446
        %s448 = sand.u32 %s242, 1
        %s449 = smul.addr %s448, 8
        %s450 = scalar_lea.vmem [#allocation2], %s449
        %p451 = pneg %p285
        %p452 = pneg %p282
        %s453 = sand.u32 %s27, 1
        %s454 = scalar_lea.sflag [#allocation5], %s453
        %s455 = sand.u32 %s272, 1
        %s456 = smul.addr %s455, 4
        %s457 = scalar_lea.vmem [#allocation4], %s456
        %p458 = pneg %p315
        %p459 = pneg %p312
        %s460 = sand.u32 %s27, 1
        %s461 = scalar_lea.sflag [#allocation5], %s460
        %s462 = sand.u32 %s302, 1
        %s463 = smul.addr %s462, 4
        %s464 = scalar_lea.vmem [#allocation6], %s463
        %p465 = scmp.lt.s32.totalorder %s32, 1
        %s466 = scalar_select %p465, %s32, 1
        %p467 = scmp.lt.s32.totalorder %s33, 0
        %s468 = scalar_select %p467, %s33, 0
        %s469 = sadd.s32 %s468, %s466
        %s470 = smul.addr %s469, 8
        %s471 = scalar_lea.vmem %s0, %s470
        %s472 = smul.u32 2, %s34
        %p473 = scmp.lt.s32.totalorder %s472, 3
        %s474 = scalar_select %p473, %s472, 3
        %s475 = smul.addr %s474, 4
        %s476 = smul.addr %s475, 4
        %s477 = scalar_lea.vmem %s1, %s476
        %s478 = smul.u32 2, %s34
        %p479 = scmp.lt.s32.totalorder %s34, 1
        %s480 = scalar_select %p479, %s34, 1
        %s481 = smul.addr %s480, 4
        %s482 = scalar_lea.vmem %s2, %s481
        %p483 = scmp.lt.s32.totalorder %s34, 1
        %s484 = scalar_select %p483, %s34, 1
        %s485 = smul.addr %s484, 4
        %s486 = smul.addr %s485, 4
        %s487 = scalar_lea.vmem %s3, %s486
        %s488 = smul.u32 2, %s34
        %p489 = scmp.lt.s32.totalorder %s488, 3
        %s490 = scalar_select %p489, %s488, 3
        %s491 = scalar_lea.vmem %s4, %s490
        %s492 = smul.u32 2, %s34
        %p493 = scmp.lt.s32.totalorder %s34, 1
        %s494 = scalar_select %p493, %s34, 1
        %s495 = smul.addr %s494, 8
        %s496 = scalar_lea.vmem %s5, %s495
        %p497 = scmp.lt.s32.totalorder %s34, 1
        %s498 = scalar_select %p497, %s34, 1
        %s499 = scalar_lea.vmem %s6, %s498
        %s500 = smul.u32 2, %s34
        %v502 = vld [vmem:[%s471] sm:$0xff]
        %v503 = vpack.c.bf16 %v502, %v502
        %v504 = vld [vmem:[%s477] sm:$0xf]
        %v505 = vld [vmem:[%s477 + $0x4] sm:$0xf]
        %v506 = vld [vmem:[%s477 + $0x8] sm:$0xf]
        %v507 = vld [vmem:[%s477 + $0xc] sm:$0xf]
        %v508 = vld [vmem:[%s491] sm:$0x1]
        %v510 = vlaneseq
        %v511 = vshrl.u32 %v510, 7
        %v512 = vsub.s32 0, %v511
        %v513 = vrot.slane %v508, %v512
        %v519 = vunpack.c.l.b16 %v504
        %v520 = vunpack.c.l.b16 %v505
        %v521 = vunpack.c.l.b16 %v506
        %v522 = vunpack.c.l.b16 %v507
        %v523 = vpack.c.b16 %v520, %v519
        %v524 = vpack.c.b16 %v522, %v521
        %vm527 = vcmask 261120
        %v529 = vsel %vm527, %v503, 0
        %531 = vmatprep.subr.bf16.mxu0 0
        %532 = vmatpush1.bf16.msra.mxu0 0
        %533 = vmatprep.subr.bf16.mxu0 0
        %534 = vmatpush1.bf16.msra.mxu0 0
        %535 = vmatprep.subr.bf16.mxu0 0
        %536 = vmatpush1.bf16.msra.mxu0 0
        %537 = vmatprep.subr.bf16.mxu0 0
        %538 = vmatpush1.bf16.msra.mxu0 0
        %539 = vmatprep.subr.bf16.mxu0 0
        %540 = vmatpush1.bf16.msra.mxu0 0
        %541 = vmatprep.subr.bf16.mxu0 0
        %542 = vmatpush1.bf16.msra.mxu0 0
        %543 = vmatprep.subr.bf16.mxu0 0
        %544 = vmatpush1.bf16.msra.mxu0 %v524
        %545 = vmatprep.subr.bf16.mxu0 0
        %546 = vmatpush1.bf16.msra.mxu0 %v523
        %547 = vmatprep.subr.bf16.mxu0 0
        %548 = vmatpush2.bf16.msra.mxu0 0
        %549 = vmatprep.subr.bf16.mxu0 0
        %550 = vmatpush2.bf16.msra.mxu0 0
        %551 = vmatprep.subr.bf16.mxu0 0
        %552 = vmatpush2.bf16.msra.mxu0 0
        %553 = vmatprep.subr.bf16.mxu0 0
        %554 = vmatpush2.bf16.msra.mxu0 0
        %555 = vmatprep.subr.bf16.mxu0 0
        %556 = vmatpush2.bf16.msra.mxu0 0
        %557 = vmatprep.subr.bf16.mxu0 0
        %558 = vmatpush2.bf16.msra.mxu0 0
        %559 = vmatprep.subr.bf16.mxu0 0
        %560 = vmatpush2.bf16.msra.mxu0 0
        %561 = vmatprep.subr.bf16.mxu0 0
        %562 = vmatpush2.bf16.msra.mxu0 0
        %563 = vmatprep.mubr.bf16.mxu0 0
        %564 = vmatmul.mubr.bf16.gmra.mxu0 %v529
        %v565 = vpop.f32.mrf.mxu0
        %v566 = vadd.f32 %v513, %v565
        %v567 = vpop.f32.mrf.mxu0
        %v568 = vpop.f32.mrf.mxu0
        %v569 = vpop.f32.mrf.mxu0
        %570 = vdwg.mxu0
        %v571 = vpack.c.bf16 %v566, %v566
        %vm572 = vcmask 60416
        %573 = vst.msk [vmem:[%s450] sm:$0xf] %vm572, %v571
        %s574 = scalar_lea.vmem %s477, 16
        %v575 = vld [vmem:[%s574] sm:$0xf]
        %v576 = vld [vmem:[%s574 + $0x4] sm:$0xf]
        %v577 = vld [vmem:[%s574 + $0x8] sm:$0xf]
        %v578 = vld [vmem:[%s574 + $0xc] sm:$0xf]
        %s579 = scalar_lea.vmem %s491, 1
        %v580 = vld [vmem:[%s579] sm:$0x1]
        %v582 = vlaneseq
        %v583 = vshrl.u32 %v582, 7
        %v584 = vsub.s32 0, %v583
        %v585 = vrot.slane %v580, %v584
        %v591 = vunpack.c.l.b16 %v575
        %v592 = vunpack.c.l.b16 %v576
        %v593 = vunpack.c.l.b16 %v577
        %v594 = vunpack.c.l.b16 %v578
        %v595 = vpack.c.b16 %v592, %v591
        %v596 = vpack.c.b16 %v594, %v593
        %599 = vmatprep.subr.bf16.mxu0 0
        %600 = vmatpush1.bf16.msra.mxu0 0
        %601 = vmatprep.subr.bf16.mxu0 0
        %602 = vmatpush1.bf16.msra.mxu0 0
        %603 = vmatprep.subr.bf16.mxu0 0
        %604 = vmatpush1.bf16.msra.mxu0 0
        %605 = vmatprep.subr.bf16.mxu0 0
        %606 = vmatpush1.bf16.msra.mxu0 0
        %607 = vmatprep.subr.bf16.mxu0 0
        %608 = vmatpush1.bf16.msra.mxu0 0
        %609 = vmatprep.subr.bf16.mxu0 0
        %610 = vmatpush1.bf16.msra.mxu0 0
        %611 = vmatprep.subr.bf16.mxu0 0
        %612 = vmatpush1.bf16.msra.mxu0 %v596
        %613 = vmatprep.subr.bf16.mxu0 0
        %614 = vmatpush1.bf16.msra.mxu0 %v595
        %615 = vmatprep.subr.bf16.mxu0 0
        %616 = vmatpush2.bf16.msra.mxu0 0
        %617 = vmatprep.subr.bf16.mxu0 0
        %618 = vmatpush2.bf16.msra.mxu0 0
        %619 = vmatprep.subr.bf16.mxu0 0
        %620 = vmatpush2.bf16.msra.mxu0 0
        %621 = vmatprep.subr.bf16.mxu0 0
        %622 = vmatpush2.bf16.msra.mxu0 0
        %623 = vmatprep.subr.bf16.mxu0 0
        %624 = vmatpush2.bf16.msra.mxu0 0
        %625 = vmatprep.subr.bf16.mxu0 0
        %626 = vmatpush2.bf16.msra.mxu0 0
        %627 = vmatprep.subr.bf16.mxu0 0
        %628 = vmatpush2.bf16.msra.mxu0 0
        %629 = vmatprep.subr.bf16.mxu0 0
        %630 = vmatpush2.bf16.msra.mxu0 0
        %631 = vmatprep.mubr.bf16.mxu0 0
        %632 = vmatmul.mubr.bf16.gmra.mxu0 %v529
        %v633 = vpop.f32.mrf.mxu0
        %v634 = vadd.f32 %v585, %v633
        %v635 = vpop.f32.mrf.mxu0
        %v636 = vpop.f32.mrf.mxu0
        %v637 = vpop.f32.mrf.mxu0
        %638 = vdwg.mxu0
        %v639 = vpack.c.bf16 %v634, %v634
        %s640 = scalar_lea.vmem %s450, 4 [#allocation2]
        %641 = vst.msk [vmem:[%s640] sm:$0xf] %vm572, %v639
        %v642 = vld [vmem:[%s482] sm:$0xf]
        %v643 = vld [vmem:[%s496] sm:$0xff]
        %645 = vset.pattern.permute.xlu0 0
        %646 = vperm.xlu0 %645, %v643
        %v647 = vpop.permute.xlu0 %646
        %v650 = vsel %vm527, %v642, 0
        %652 = vmatprep.subr.bf16.mxu0 0
        %653 = vmatpush1.bf16.xpose.msra.mxu0 0
        %654 = vmatprep.subr.bf16.mxu0 0
        %655 = vmatpush1.bf16.xpose.msra.mxu0 0
        %656 = vmatprep.subr.bf16.mxu0 0
        %657 = vmatpush1.bf16.xpose.msra.mxu0 0
        %658 = vmatprep.subr.bf16.mxu0 0
        %659 = vmatpush1.bf16.xpose.msra.mxu0 0
        %660 = vmatprep.subr.bf16.mxu0 0
        %661 = vmatpush1.bf16.xpose.msra.mxu0 0
        %662 = vmatprep.subr.bf16.mxu0 0
        %663 = vmatpush1.bf16.xpose.msra.mxu0 0
        %664 = vmatprep.subr.bf16.mxu0 0
        %665 = vmatpush1.bf16.xpose.msra.mxu0 0
        %666 = vmatprep.subr.bf16.mxu0 0
        %667 = vmatpush1.bf16.xpose.msra.mxu0 %v529
        %668 = vmatprep.subr.bf16.mxu0 0
        %669 = vmatpush2.bf16.xpose.msra.mxu0 0
        %670 = vmatprep.subr.bf16.mxu0 0
        %671 = vmatpush2.bf16.xpose.msra.mxu0 0
        %672 = vmatprep.subr.bf16.mxu0 0
        %673 = vmatpush2.bf16.xpose.msra.mxu0 0
        %674 = vmatprep.subr.bf16.mxu0 0
        %675 = vmatpush2.bf16.xpose.msra.mxu0 0
        %676 = vmatprep.subr.bf16.mxu0 0
        %677 = vmatpush2.bf16.xpose.msra.mxu0 0
        %678 = vmatprep.subr.bf16.mxu0 0
        %679 = vmatpush2.bf16.xpose.msra.mxu0 0
        %680 = vmatprep.subr.bf16.mxu0 0
        %681 = vmatpush2.bf16.xpose.msra.mxu0 0
        %682 = vmatprep.subr.bf16.mxu0 0
        %683 = vmatpush2.bf16.xpose.msra.mxu0 0
        %684 = vmatprep.mubr.bf16.mxu0 0
        %685 = vmatmul.mubr.bf16.gmra.mxu0 %v650
        %v686 = vpop.f32.mrf.mxu0
        %v687 = vadd.f32 %v647, %v686
        %v688 = vpop.f32.mrf.mxu0
        %v689 = vpop.f32.mrf.mxu0
        %v690 = vpop.f32.mrf.mxu0
        %691 = vdwg.mxu0
        %v692 = vpack.c.bf16 %v687, %v687
        %693 = vst.msk [vmem:[%s457] sm:$0xf] %vm572, %v692
        %v694 = vld [vmem:[%s487] sm:$0xf]
        %v695 = vld [vmem:[%s487 + $0x4] sm:$0xf]
        %v696 = vld [vmem:[%s487 + $0x8] sm:$0xf]
        %v697 = vld [vmem:[%s487 + $0xc] sm:$0xf]
        %v698 = vld [vmem:[%s499] sm:$0x1]
        %v700 = vlaneseq
        %v701 = vshrl.u32 %v700, 7
        %v702 = vsub.s32 0, %v701
        %v703 = vrot.slane %v698, %v702
        %v709 = vunpack.c.l.b16 %v694
        %v710 = vunpack.c.l.b16 %v695
        %v711 = vunpack.c.l.b16 %v696
        %v712 = vunpack.c.l.b16 %v697
        %v713 = vpack.c.b16 %v710, %v709
        %v714 = vpack.c.b16 %v712, %v711
        %717 = vmatprep.subr.bf16.mxu0 0
        %718 = vmatpush1.bf16.msra.mxu0 0
        %719 = vmatprep.subr.bf16.mxu0 0
        %720 = vmatpush1.bf16.msra.mxu0 0
        %721 = vmatprep.subr.bf16.mxu0 0
        %722 = vmatpush1.bf16.msra.mxu0 0
        %723 = vmatprep.subr.bf16.mxu0 0
        %724 = vmatpush1.bf16.msra.mxu0 0
        %725 = vmatprep.subr.bf16.mxu0 0
        %726 = vmatpush1.bf16.msra.mxu0 0
        %727 = vmatprep.subr.bf16.mxu0 0
        %728 = vmatpush1.bf16.msra.mxu0 0
        %729 = vmatprep.subr.bf16.mxu0 0
        %730 = vmatpush1.bf16.msra.mxu0 %v714
        %731 = vmatprep.subr.bf16.mxu0 0
        %732 = vmatpush1.bf16.msra.mxu0 %v713
        %733 = vmatprep.subr.bf16.mxu0 0
        %734 = vmatpush2.bf16.msra.mxu0 0
        %735 = vmatprep.subr.bf16.mxu0 0
        %736 = vmatpush2.bf16.msra.mxu0 0
        %737 = vmatprep.subr.bf16.mxu0 0
        %738 = vmatpush2.bf16.msra.mxu0 0
        %739 = vmatprep.subr.bf16.mxu0 0
        %740 = vmatpush2.bf16.msra.mxu0 0
        %741 = vmatprep.subr.bf16.mxu0 0
        %742 = vmatpush2.bf16.msra.mxu0 0
        %743 = vmatprep.subr.bf16.mxu0 0
        %744 = vmatpush2.bf16.msra.mxu0 0
        %745 = vmatprep.subr.bf16.mxu0 0
        %746 = vmatpush2.bf16.msra.mxu0 0
        %747 = vmatprep.subr.bf16.mxu0 0
        %748 = vmatpush2.bf16.msra.mxu0 0
        %749 = vmatprep.mubr.bf16.mxu0 0
        %750 = vmatmul.mubr.bf16.gmra.mxu0 %v529
        %v751 = vpop.f32.mrf.mxu0
        %v752 = vadd.f32 %v703, %v751
        %v753 = vpop.f32.mrf.mxu0
        %v754 = vpop.f32.mrf.mxu0
        %v755 = vpop.f32.mrf.mxu0
        %756 = vdwg.mxu0
        %v757 = vpack.c.bf16 %v752, %v752
        %758 = vst.msk [vmem:[%s464] sm:$0xf] %vm572, %v757
        %s759 = sand.u32 %s242, 1
        %s760 = scalar_lea.sflag [#allocation3], %s759
        %s761 = sand.u32 %s242, 1
        %s762 = smul.addr %s761, 8
        %s763 = scalar_lea.vmem [#allocation2], %s762
        %s764 = sand.u32 %s27, 1
        %s765 = scalar_lea.sflag [#allocation5], %s764
        %s766 = sand.u32 %s272, 1
        %s767 = smul.addr %s766, 4
        %s768 = scalar_lea.vmem [#allocation4], %s767
        %s769 = sand.u32 %s27, 1
        %s770 = scalar_lea.sflag [#allocation5], %s769
        %s771 = sand.u32 %s302, 1
        %s772 = smul.addr %s771, 4
        %s773 = scalar_lea.vmem [#allocation6], %s772
        // Predicated region
        $region49: #{tpu_custom_call.1} parent=47 // pred_check
          %p774 = pneg %p252
        $region50: #{tpu_custom_call.1} parent=47 // pred_check_branch
          %776 = sbr.rel (%p774) target = $region52
        $region51: #{tpu_custom_call.1} parent=47 // pred_region
          %s777 = smul.u32 2, %s34
          %s779 = ssub.s32 128, 128
          %780 = vsyncadd %s760, %s779
          %s781 = sadd.s32 %s33, %s777
          %s782 = smul.addr %s32, 4
          %s783 = sadd.s32 %s781, %s782
          %s784 = smul.addr %s783, 64
          %s785 = scalar_lea.hbm %s7, %s784
          %s786 = sshll.u32 %s763, 4
          %s787 = int_to_ptr.vmem [resolvable:$true] %s786
          %792 = dma.vmem_to_hbm [thread:$0]  %s787, 128, %s785, %s760, 64, 64, 4
        $region52: #{tpu_custom_call.1} parent=47 // pred_fallthru
          _
        // Predicated region
        $region53: #{tpu_custom_call.1} parent=47 // pred_check
          %p793 = pneg %p282
        $region54: #{tpu_custom_call.1} parent=47 // pred_check_branch
          %795 = sbr.rel (%p793) target = $region56
        $region55: #{tpu_custom_call.1} parent=47 // pred_region
          %s797 = ssub.s32 64, 64
          %798 = vsyncadd %s765, %s797
          %s799 = sadd.s32 %s33, %s34
          %s800 = smul.addr %s32, 2
          %s801 = sadd.s32 %s799, %s800
          %s802 = smul.addr %s801, 64
          %s803 = scalar_lea.hbm %s8, %s802
          %s805 = sshll.u32 %s768, 4
          %s806 = int_to_ptr.vmem [resolvable:$true] %s805
          %808 = dma.vmem_to_hbm [thread:$0]  %s806, 64, %s803, %s765
        $region56: #{tpu_custom_call.1} parent=47 // pred_fallthru
          _
        // Predicated region
        $region57: #{tpu_custom_call.1} parent=47 // pred_check
          %p809 = pneg %p312
        $region58: #{tpu_custom_call.1} parent=47 // pred_check_branch
          %811 = sbr.rel (%p809) target = $region60
        $region59: #{tpu_custom_call.1} parent=47 // pred_region
          %s813 = ssub.s32 64, 64
          %814 = vsyncadd %s770, %s813
          %s815 = sadd.s32 %s33, %s34
          %s816 = smul.addr %s32, 2
          %s817 = sadd.s32 %s815, %s816
          %s818 = smul.addr %s817, 64
          %s819 = scalar_lea.hbm %s9, %s818
          %s821 = sshll.u32 %s773, 4
          %s822 = int_to_ptr.vmem [resolvable:$true] %s821
          %824 = dma.vmem_to_hbm [thread:$0]  %s822, 64, %s819, %s770
        $region60: #{tpu_custom_call.1} parent=47 // pred_fallthru
          _
      $region48: #{tpu_custom_call.1} parent=5 // pred_fallthru
        _
      %p825 = scmp.le.s32.totalorder 2, %s22
      // Predicated region
      $region61: #{tpu_custom_call.1} parent=5 // pred_check
        %p826 = pneg %p825
      $region62: #{tpu_custom_call.1} parent=5 // pred_check_branch
        %828 = sbr.rel (%p826) target = $region64
      $region63: #{tpu_custom_call.1} parent=5 // pred_region
        %s829 = ssub.s32 %s22, 2
        // Predicated region
        $region65: #{tpu_custom_call.1} parent=63 // pred_check
          %p830 = pneg %p258
        $region66: #{tpu_custom_call.1} parent=63 // pred_check_branch
          %832 = sbr.rel (%p830) target = $region68
        $region67: #{tpu_custom_call.1} parent=63 // pred_region
          %s833 = sand.u32 %s243, 1
          %s834 = scalar_lea.sflag [#allocation3], %s833
          %s835 = sand.u32 %s243, 1
          %s836 = smul.addr %s835, 8
          %s837 = scalar_lea.vmem [#allocation2], %s836
          %838 = dma.done %s834, 128
        $region68: #{tpu_custom_call.1} parent=63 // pred_fallthru
          _
        // Predicated region
        $region69: #{tpu_custom_call.1} parent=63 // pred_check
          %p839 = pneg %p288
        $region70: #{tpu_custom_call.1} parent=63 // pred_check_branch
          %841 = sbr.rel (%p839) target = $region72
        $region71: #{tpu_custom_call.1} parent=63 // pred_region
          %s842 = sand.u32 %s28, 1
          %s843 = scalar_lea.sflag [#allocation5], %s842
          %s844 = sand.u32 %s273, 1
          %s845 = smul.addr %s844, 4
          %s846 = scalar_lea.vmem [#allocation4], %s845
          %847 = dma.done %s843, 64
        $region72: #{tpu_custom_call.1} parent=63 // pred_fallthru
          _
        // Predicated region
        $region73: #{tpu_custom_call.1} parent=63 // pred_check
          %p848 = pneg %p318
        $region74: #{tpu_custom_call.1} parent=63 // pred_check_branch
          %850 = sbr.rel (%p848) target = $region76
        $region75: #{tpu_custom_call.1} parent=63 // pred_region
          %s851 = sand.u32 %s28, 1
          %s852 = scalar_lea.sflag [#allocation5], %s851
          %s853 = sand.u32 %s303, 1
          %s854 = smul.addr %s853, 4
          %s855 = scalar_lea.vmem [#allocation6], %s854
          %856 = dma.done %s852, 64
        $region76: #{tpu_custom_call.1} parent=63 // pred_fallthru
          _
      $region64: #{tpu_custom_call.1} parent=5 // pred_fallthru
        _
    $region6: #{tpu_custom_call.1} parent=1 // loop_footer
      %s26 = sadd.s32 1, %s22
    $region7: #{tpu_custom_call.1} parent=1 // loop_footer_branch
      %21 = sbr.rel target = $region3
    $region8: #{tpu_custom_call.1} parent=1 // loop_exit
      _
    %857 = vsyncpa [#allocation3], 1
    %s858 = scalar_lea.sflag [#allocation3], 1
    %859 = vsyncpa %s858, 1
    %860 = vsyncpa [#allocation5], 1
    %s861 = scalar_lea.sflag [#allocation5], 1
    %862 = vsyncpa %s861, 1

</llo_original>
